<compile_context>
chip_gen: v5e
topology: v5e:2x2
jax: 0.10.0
libtpu: 0.0.40
codegen_flags: <defaults>
</compile_context>

<pallas_src>
import math

import jax
import jax.numpy as jnp
from jax import lax
from jax.experimental import pallas as pl
from jax.experimental.pallas import tpu as pltpu


def make_sce_loss_kernel(alpha=1.0, beta=1.0, num_classes=10, max_tile_n=65536):
    alpha = float(alpha)
    beta = float(beta)
    neg_log_smooth = -math.log(1e-4)  # -log(clamped one-hot) on off-classes

    def sce_loss(pred, labels):
        n, c = pred.shape
        assert c == num_classes
        # TODO(synk): torch CrossEntropyLoss ignore_index=-100 is not handled;
        # labels are assumed to be valid class indices in [0, num_classes).

        # ---- batch tiling: 2 "parallel" halves x "arbitrary" reduction tiles ----
        half = pl.cdiv(n, 2)
        tile_n = min(int(max_tile_n), 128 * pl.cdiv(half, 128))  # lane-aligned
        tiles_per_core = pl.cdiv(half, tile_n)
        n_pad = 2 * tiles_per_core * tile_n

        # classes -> sublanes, batch -> 128-wide lanes; keep input dtype (bf16 stays bf16)
        pred_t = jnp.pad(pred.T, ((0, 0), (0, n_pad - n)))
        labels_2d = jnp.pad(labels.astype(jnp.int32), (0, n_pad - n)).reshape(1, n_pad)

        def kernel(pred_ref, labels_ref, out_ref, acc_ref):
            p_id = pl.program_id(0)   # parallel half (megacore split on v7x)
            i = pl.program_id(1)      # reduction step over batch tiles

            @pl.when(i == 0)
            def _init():
                acc_ref[...] = jnp.zeros_like(acc_ref)

            logits = pred_ref[...].astype(jnp.float32)           # (C, tile_n)
            lbl = labels_ref[...]                                # (1, tile_n) i32
            cc, tn = logits.shape

            row_ids = lax.broadcasted_iota(jnp.int32, (cc, tn), 0)
            one_hot = row_ids == lbl                             # (C, tile_n)

            # ---- cross entropy (numerically stable), per sample ----
            cmax = jnp.max(logits, axis=0, keepdims=True)        # (1, tile_n)
            shifted = logits - cmax
            exp_s = jnp.exp(shifted)                             # (C, tile_n)
            sum_exp = jnp.sum(exp_s, axis=0, keepdims=True)      # (1, tile_n)
            # ce_i = logsumexp_i - x_true = log(sum_exp) - (x_true - cmax)
            true_shifted = jnp.sum(jnp.where(one_hot, shifted, 0.0),
                                   axis=0, keepdims=True)        # (1, tile_n)
            ce_per = jnp.log(sum_exp) - true_shifted             # (1, tile_n)

            # ---- reverse cross entropy, fused true-class form ----
            # rce_i = -log(1e-4) * sum_{c != y_i} max(softmax_ic, 1e-7)
            inv = pl.reciprocal(sum_exp, approx=True)            # EUP slot
            inv = inv * (2.0 - sum_exp * inv)                    # one Newton step
            p_clip = jnp.maximum(exp_s * inv, 1e-7)              # (C, tile_n)
            off_sum = jnp.sum(jnp.where(one_hot, 0.0, p_clip),
                              axis=0, keepdims=True)             # (1, tile_n)
            rce_per = neg_log_smooth * off_sum

            contrib = alpha * ce_per + beta * rce_per            # (1, tile_n)

            tile_start = (p_id * tiles_per_core + i) * tile_n

            @pl.when(tile_start + tile_n > n)     # only tiles containing padding
            def _accumulate_masked():
                col = tile_start + lax.broadcasted_iota(jnp.int32, (1, tn), 1)
                acc_ref[...] += jnp.where(col < n, contrib, 0.0)

            @pl.when(tile_start + tile_n <= n)    # full tiles: no mask cost
            def _accumulate_full():
                acc_ref[...] += contrib

            @pl.when(i == pl.num_programs(1) - 1)
            def _finalize():
                out_ref[...] = jnp.full(out_ref.shape, jnp.sum(acc_ref[...]),
                                        dtype=out_ref.dtype)

        partials = pl.pallas_call(
            kernel,
            out_shape=jax.ShapeDtypeStruct((2, 1, 128), jnp.float32),
            grid_spec=pltpu.PrefetchScalarGridSpec(
                num_scalar_prefetch=0,
                grid=(2, tiles_per_core),
                in_specs=[
                    pl.BlockSpec((num_classes, tile_n),
                                 lambda p, i: (0, p * tiles_per_core + i)),
                    pl.BlockSpec((1, tile_n),
                                 lambda p, i: (0, p * tiles_per_core + i)),
                ],
                out_specs=pl.BlockSpec((1, 1, 128), lambda p, i: (p, 0, 0)),
                scratch_shapes=[pltpu.VMEM((1, tile_n), jnp.float32)],
            ),
            compiler_params=pltpu.CompilerParams(
                dimension_semantics=("parallel", "arbitrary")),
        )(pred_t, labels_2d)

        # two per-core weighted partial sums -> mean over the true batch size
        return (partials[0, 0, 0] + partials[1, 0, 0]) / jnp.float32(n)

    return sce_loss


def sce_loss_ref(pred, labels, alpha=1.0, beta=1.0, num_classes=10):
    # pure-JAX reference mirroring the PyTorch module
    pred = pred.astype(jnp.float32)
    logp = jax.nn.log_softmax(pred, axis=1)
    ce = -jnp.mean(jnp.take_along_axis(logp, labels[:, None], axis=1))
    p = jnp.clip(jax.nn.softmax(pred, axis=1), 1e-7, 1.0)
    oh = jnp.clip(jax.nn.one_hot(labels, num_classes), 1e-4, 1.0)
    rce = -jnp.sum(p * jnp.log(oh), axis=1)
    return alpha * ce + beta * jnp.mean(rce)


if __name__ == "__main__":
    num_classes = 10

    # primary small example
    key = jax.random.PRNGKey(0)
    k_pred, k_lab = jax.random.split(key)
    batch = 8
    pred = jax.random.normal(k_pred, (batch, num_classes), dtype=jnp.float32)
    labels = jax.random.randint(k_lab, (batch,), 0, num_classes, dtype=jnp.int32)

    sce = make_sce_loss_kernel(alpha=1.0, beta=1.0, num_classes=num_classes)
    loss = sce(pred, labels)
    jax.block_until_ready(loss)
    ref = sce_loss_ref(pred, labels, 1.0, 1.0, num_classes)
    assert jnp.allclose(loss, ref, rtol=1e-5, atol=1e-4), (loss, ref)

    # second config: multiple inner tiles, masked + unmasked tiles, both halves
    k_pred2, k_lab2 = jax.random.split(jax.random.PRNGKey(0), 2)
    batch2 = 300
    pred2 = jax.random.normal(k_pred2, (batch2, num_classes), dtype=jnp.float32)
    labels2 = jax.random.randint(k_lab2, (batch2,), 0, num_classes, dtype=jnp.int32)

    sce_small_tiles = make_sce_loss_kernel(alpha=0.5, beta=2.0,
                                           num_classes=num_classes, max_tile_n=128)
    loss2 = sce_small_tiles(pred2, labels2)
    jax.block_until_ready(loss2)
    ref2 = sce_loss_ref(pred2, labels2, 0.5, 2.0, num_classes)
    assert jnp.allclose(loss2, ref2, rtol=1e-5, atol=1e-4), (loss2, ref2)

    print("KERNEL_OK")
</pallas_src>

<mosaic_0001>
module attributes {stable_mosaic.version = 11 : i64} {
  func.func @kernel(%arg0: i32, %arg1: i32, %arg2: memref<10x128xf32, #tpu.memory_space<vmem>>, %arg3: memref<1x128xi32, #tpu.memory_space<vmem>>, %arg4: memref<1x1x128xf32, #tpu.memory_space<vmem>>, %arg5: memref<1x128xf32, #tpu.memory_space<vmem>>) attributes {dimension_semantics = [#tpu.dimension_semantics<parallel>, #tpu.dimension_semantics<arbitrary>], iteration_bounds = array<i64: 2, 1>, scalar_prefetch = 0 : i64, scratch_operands = 1 : i64, tpu.core_type = #tpu.core_type<tc>, window_params = [{transform_indices = @transform_0, window_bounds = array<i64: 10, 128>}, {transform_indices = @transform_1, window_bounds = array<i64: 1, 128>}, {transform_indices = @transform_2, window_bounds = array<i64: 1, 1, 128>}]} {
    %c0_i32 = arith.constant 0 : i32
    %0 = arith.cmpi eq, %arg1, %c0_i32 : i32
    %1 = arith.extui %0 : i1 to i32
    %c0_i32_0 = arith.constant 0 : i32
    %2 = arith.cmpi ne, %1, %c0_i32_0 : i32
    scf.if %2 {
      %cst_21 = arith.constant 0.000000e+00 : f32
      %55 = vector.broadcast %cst_21 : f32 to vector<1x128xf32>
      %c0_22 = arith.constant 0 : index
      %c0_23 = arith.constant 0 : index
      %56 = vector.load %arg5[%c0_22, %c0_23] : memref<1x128xf32, #tpu.memory_space<vmem>>, vector<1x128xf32>
      tpu.vector_store %arg5[%c0_22, %c0_23], %55 {strides = array<i32>} : memref<1x128xf32, #tpu.memory_space<vmem>>, vector<1x128xf32>,
    } else {
    }
    %c0 = arith.constant 0 : index
    %c0_1 = arith.constant 0 : index
    %3 = vector.load %arg2[%c0, %c0_1] : memref<10x128xf32, #tpu.memory_space<vmem>>, vector<10x128xf32>
    %c0_2 = arith.constant 0 : index
    %c0_3 = arith.constant 0 : index
    %4 = vector.load %arg3[%c0_2, %c0_3] : memref<1x128xi32, #tpu.memory_space<vmem>>, vector<1x128xi32>
    %5 = tpu.iota {dimensions = array<i32: 0>} : vector<10x128xi32>
    %6 = vector.broadcast %4 : vector<1x128xi32> to vector<10x128xi32>
    %7 = arith.cmpi eq, %5, %6 : vector<10x128xi32>
    %cst = arith.constant dense<0xFF800000> : vector<128xf32>
    %8 = vector.multi_reduction <maximumf>, %3, %cst [0] : vector<10x128xf32> to vector<128xf32>
    %9 = vector.shape_cast %8 : vector<128xf32> to vector<1x128xf32>
    %10 = vector.broadcast %9 : vector<1x128xf32> to vector<10x128xf32>
    %11 = arith.subf %3, %10 : vector<10x128xf32>
    %12 = math.exp %11 : vector<10x128xf32>
    %cst_4 = arith.constant dense<0.000000e+00> : vector<128xf32>
    %13 = vector.multi_reduction <add>, %12, %cst_4 [0] : vector<10x128xf32> to vector<128xf32>
    %14 = vector.shape_cast %13 : vector<128xf32> to vector<1x128xf32>
    %cst_5 = arith.constant 0.000000e+00 : f32
    %15 = vector.broadcast %cst_5 : f32 to vector<10x128xf32>
    %16 = arith.select %7, %11, %15 : vector<10x128xi1>, vector<10x128xf32>
    %cst_6 = arith.constant dense<0.000000e+00> : vector<128xf32>
    %17 = vector.multi_reduction <add>, %16, %cst_6 [0] : vector<10x128xf32> to vector<128xf32>
    %18 = vector.shape_cast %17 : vector<128xf32> to vector<1x128xf32>
    %19 = math.log %14 : vector<1x128xf32>
    %20 = arith.subf %19, %18 : vector<1x128xf32>
    %21 = tpu.reciprocal %14 {approx = true} : vector<1x128xf32> -> vector<1x128xf32>
    %22 = arith.mulf %14, %21 : vector<1x128xf32>
    %cst_7 = arith.constant 2.000000e+00 : f32
    %23 = vector.broadcast %cst_7 : f32 to vector<1x128xf32>
    %24 = arith.subf %23, %22 : vector<1x128xf32>
    %25 = arith.mulf %21, %24 : vector<1x128xf32>
    %26 = vector.broadcast %25 : vector<1x128xf32> to vector<10x128xf32>
    %27 = arith.mulf %12, %26 : vector<10x128xf32>
    %cst_8 = arith.constant 1.000000e-07 : f32
    %28 = vector.broadcast %cst_8 : f32 to vector<10x128xf32>
    %29 = arith.maximumf %27, %28 : vector<10x128xf32>
    %cst_9 = arith.constant 0.000000e+00 : f32
    %30 = vector.broadcast %cst_9 : f32 to vector<10x128xf32>
    %31 = arith.select %7, %30, %29 : vector<10x128xi1>, vector<10x128xf32>
    %cst_10 = arith.constant dense<0.000000e+00> : vector<128xf32>
    %32 = vector.multi_reduction <add>, %31, %cst_10 [0] : vector<10x128xf32> to vector<128xf32>
    %33 = vector.shape_cast %32 : vector<128xf32> to vector<1x128xf32>
    %cst_11 = arith.constant 9.21034049 : f32
    %34 = vector.broadcast %cst_11 : f32 to vector<1x128xf32>
    %35 = arith.mulf %34, %33 : vector<1x128xf32>
    %cst_12 = arith.constant 1.000000e+00 : f32
    %36 = vector.broadcast %cst_12 : f32 to vector<1x128xf32>
    %37 = arith.mulf %36, %20 : vector<1x128xf32>
    %cst_13 = arith.constant 1.000000e+00 : f32
    %38 = vector.broadcast %cst_13 : f32 to vector<1x128xf32>
    %39 = arith.mulf %38, %35 : vector<1x128xf32>
    %40 = arith.addf %37, %39 : vector<1x128xf32>
    %c1_i32 = arith.constant 1 : i32
    %41 = arith.muli %arg0, %c1_i32 : i32
    %42 = arith.addi %41, %arg1 : i32
    %c128_i32 = arith.constant 128 : i32
    %43 = arith.muli %42, %c128_i32 : i32
    %c128_i32_14 = arith.constant 128 : i32
    %44 = arith.addi %43, %c128_i32_14 : i32
    %c8_i32 = arith.constant 8 : i32
    %45 = arith.cmpi sgt, %44, %c8_i32 : i32
    %46 = arith.extui %45 : i1 to i32
    %c0_i32_15 = arith.constant 0 : i32
    %47 = arith.cmpi ne, %46, %c0_i32_15 : i32
    scf.if %47 {
      %55 = tpu.iota {dimensions = array<i32: 1>} : vector<1x128xi32>
      %56 = vector.broadcast %43 : i32 to vector<1x128xi32>
      %57 = arith.addi %56, %55 : vector<1x128xi32>
      %c0_21 = arith.constant 0 : index
      %c0_22 = arith.constant 0 : index
      %58 = vector.load %arg5[%c0_21, %c0_22] : memref<1x128xf32, #tpu.memory_space<vmem>>, vector<1x128xf32>
      %c8_i32_23 = arith.constant 8 : i32
      %59 = vector.broadcast %c8_i32_23 : i32 to vector<1x128xi32>
      %60 = arith.cmpi slt, %57, %59 : vector<1x128xi32>
      %cst_24 = arith.constant 0.000000e+00 : f32
      %61 = vector.broadcast %cst_24 : f32 to vector<1x128xf32>
      %62 = arith.select %60, %40, %61 : vector<1x128xi1>, vector<1x128xf32>
      %63 = arith.addf %58, %62 : vector<1x128xf32>
      %c0_25 = arith.constant 0 : index
      %c0_26 = arith.constant 0 : index
      %64 = vector.load %arg5[%c0_25, %c0_26] : memref<1x128xf32, #tpu.memory_space<vmem>>, vector<1x128xf32>
      tpu.vector_store %arg5[%c0_25, %c0_26], %63 {strides = array<i32>} : memref<1x128xf32, #tpu.memory_space<vmem>>, vector<1x128xf32>,
    } else {
    }
    %c128_i32_16 = arith.constant 128 : i32
    %48 = arith.addi %43, %c128_i32_16 : i32
    %c8_i32_17 = arith.constant 8 : i32
    %49 = arith.cmpi sle, %48, %c8_i32_17 : i32
    %50 = arith.extui %49 : i1 to i32
    %c0_i32_18 = arith.constant 0 : i32
    %51 = arith.cmpi ne, %50, %c0_i32_18 : i32
    scf.if %51 {
      %c0_21 = arith.constant 0 : index
      %c0_22 = arith.constant 0 : index
      %55 = vector.load %arg5[%c0_21, %c0_22] : memref<1x128xf32, #tpu.memory_space<vmem>>, vector<1x128xf32>
      %56 = arith.addf %55, %40 : vector<1x128xf32>
      %c0_23 = arith.constant 0 : index
      %c0_24 = arith.constant 0 : index
      %57 = vector.load %arg5[%c0_23, %c0_24] : memref<1x128xf32, #tpu.memory_space<vmem>>, vector<1x128xf32>
      tpu.vector_store %arg5[%c0_23, %c0_24], %56 {strides = array<i32>} : memref<1x128xf32, #tpu.memory_space<vmem>>, vector<1x128xf32>,
    } else {
    }
    %c0_i32_19 = arith.constant 0 : i32
    %52 = arith.cmpi eq, %arg1, %c0_i32_19 : i32
    %53 = arith.extui %52 : i1 to i32
    %c0_i32_20 = arith.constant 0 : i32
    %54 = arith.cmpi ne, %53, %c0_i32_20 : i32
    scf.if %54 {
      %c0_21 = arith.constant 0 : index
      %c0_22 = arith.constant 0 : index
      %55 = vector.load %arg5[%c0_21, %c0_22] : memref<1x128xf32, #tpu.memory_space<vmem>>, vector<1x128xf32>
      %56 = vector.shape_cast %55 : vector<1x128xf32> to vector<1x1x128xf32>
      %cst_23 = arith.constant dense<0.000000e+00> : vector<1xf32>
      %57 = vector.multi_reduction <add>, %56, %cst_23 [1, 2] : vector<1x1x128xf32> to vector<1xf32>
      %58 = vector.shape_cast %57 : vector<1xf32> to vector<1x1x1xf32>
      %59 = vector.extract %58[0, 0, 0] : f32 from vector<1x1x1xf32>
      %60 = vector.broadcast %59 : f32 to vector<1x1x128xf32>
      %c0_24 = arith.constant 0 : index
      %c0_25 = arith.constant 0 : index
      %c0_26 = arith.constant 0 : index
      %61 = vector.load %arg4[%c0_24, %c0_25, %c0_26] : memref<1x1x128xf32, #tpu.memory_space<vmem>>, vector<1x1x128xf32>
      tpu.vector_store %arg4[%c0_24, %c0_25, %c0_26], %60 {strides = array<i32>} : memref<1x1x128xf32, #tpu.memory_space<vmem>>, vector<1x1x128xf32>,
    } else {
    }
    return
  }
  func.func @transform_0(%arg0: i32, %arg1: i32) -> (i32, i32) {
    %c1_i32 = arith.constant 1 : i32
    %0 = arith.muli %arg0, %c1_i32 : i32
    %1 = arith.addi %0, %arg1 : i32
    %c0_i32 = arith.constant 0 : i32
    %c0_i32_0 = arith.constant 0 : i32
    return %c0_i32, %1 : i32, i32
  }
  func.func @transform_1(%arg0: i32, %arg1: i32) -> (i32, i32) {
    %c1_i32 = arith.constant 1 : i32
    %0 = arith.muli %arg0, %c1_i32 : i32
    %1 = arith.addi %0, %arg1 : i32
    %c0_i32 = arith.constant 0 : i32
    %c0_i32_0 = arith.constant 0 : i32
    return %c0_i32, %1 : i32, i32
  }
  func.func @transform_2(%arg0: i32, %arg1: i32) -> (i32, i32, i32) {
    %c0_i32 = arith.constant 0 : i32
    %c0_i32_0 = arith.constant 0 : i32
    %c0_i32_1 = arith.constant 0 : i32
    return %arg0, %c0_i32, %c0_i32_0 : i32, i32, i32
  }
}

</mosaic_0001>

<llo_original>
// kernel: tpu_custom_call.1
$region0: #{tpu_custom_call.1}
  #allocation0 [shape = 'u32[]', space=smem, size = 0x4, offset = 0x4, fixed_abs, tag = 'smem constant byte address 0x4 - core index']
  #allocation1 [shape = 'u32[72,128]{1,0:T(1,128)}', space=vmem, size = 0x9000, scoped, tag = 'internal scratch']
  #allocation2 [shape = 'f32[1,128]{1,0:T(1,128)}', space=vmem, size = 0x200, scoped, tag = 'scratch operand']
  %s0 = inlined_call_operand.hbm [shape: f32[10,256], index: 0, kind: input, shape index: {}]
  %s1 = inlined_call_operand.hbm [shape: s32[1,256], index: 1, kind: input, shape index: {}]
  %s2 = inlined_call_operand.hbm [shape: f32[2,1,128], index: 2, kind: output, shape index: {}]
  %s3 = sld [smem:[#allocation0]]
  $region65: #{tpu_custom_call.1} parent=0
    _
  %s5 = ssub.s32 1, %s3
  %s6 = scalar_select 0, %s5, %s3
  $region1: #{tpu_custom_call.1} parent=0
    #allocation3 [shape = 'u8[16384]{0}', space=vmem, size = 0x4000, scoped, tag = 'input window, operand 0']
    #allocation4 [shape = 's32[2]{0}', space=sflag, size = 0x8, scoped, tag = 'scoped memory for tpu_custom_call.1']
    #allocation5 [shape = 's32[2]{0}', space=sflag, size = 0x8, scoped, tag = 'scoped memory for tpu_custom_call.1']
    #allocation6 [shape = 'u8[1024]{0}', space=vmem, size = 0x400, scoped, tag = 'input window, operand 1']
    #allocation7 [shape = 's32[2]{0}', space=sflag, size = 0x8, scoped, tag = 'scoped memory for tpu_custom_call.1']
    #allocation8 [shape = 'u8[1024]{0}', space=vmem, size = 0x400, scoped, tag = 'output window, operand 0']
    %7 = vsyncpa [#allocation4], 0
    %s8 = scalar_lea.sflag [#allocation4], 1
    %9 = vsyncpa %s8, 0
    %10 = vsyncpa [#allocation7], 0
    %s11 = scalar_lea.sflag [#allocation7], 1
    %12 = vsyncpa %s11, 0
    %13 = vsyncpa [#allocation5], 0
    %s14 = scalar_lea.sflag [#allocation5], 1
    %15 = vsyncpa %s14, 0
    loop: start=0, step=1, limit=4
    $region2: #{tpu_custom_call.1} parent=1 // loop_pre_header
      _
    $region3: #{tpu_custom_call.1} parent=1 // loop_header
      %s17 = sphi 0, %s21
      %p18 = scmp.ge.s32.totalorder %s17, 4
      %s24 = sphi 0, %s36
      %s25 = sphi 0, %s32
      %s26 = sphi 0, %s24
      %s27 = sphi 0, %s25
      %s28 = sphi 0, %s26
      %s29 = sphi 0, %s27
      %s41 = sphi 0, %s43
      %s44 = sphi 0, %s41
      %s45 = sphi 0, %s44
      %s61 = sphi 0, %s45
      %s69 = sphi 0, %s71
      %s72 = sphi 0, %s69
      %s73 = sphi 0, %s72
      %s89 = sphi 0, %s73
      %s95 = sphi 0, %s97
      %s98 = sphi 0, %s95
      %s99 = sphi 0, %s98
      %s115 = sphi 0, %s99
    $region4: #{tpu_custom_call.1} parent=1 // loop_header_branch
      %20 = sbr.rel (%p18) target = $region8
    $region5: #{tpu_custom_call.1} parent=1 // loop_body
      %s22 = ssub.s32 %s17, 1
      %s23 = ssub.s32 %s17, 2
      %s30 = sadd.s32 1, %s25
      %p31 = scmp.ge.s32.totalorder %s30, 1
      %s32 = scalar_select %p31, 0, %s30
      %s33 = sadd.s32 1, %s24
      %s34 = scalar_select %p31, %s33, %s24
      %p35 = scmp.ge.s32.totalorder %s34, 2
      %s36 = scalar_select %p35, 0, %s34
      %s37 = sadd.s32 %s24, %s25
      %s38 = sadd.s32 %s36, %s32
      %s39 = ssub.s32 %s37, %s38
      %p40 = scmp.eq.s32.totalorder %s39, 0
      %s42 = sadd.s32 %s41, 1
      %s43 = scalar_select %p40, %s41, %s42
      %p46 = pneg %p40
      %p47 = scmp.eq.s32.totalorder %s17, 1
      %p48 = por %p46, %p47
      %p49 = scmp.ne.s32.totalorder %s41, %s44
      %p50 = scmp.eq.s32.totalorder %s17, 0
      %p51 = por %p49, %p50
      %p52 = scmp.ne.s32.totalorder %s41, %s44
      %p53 = scmp.eq.s32.totalorder %s22, 1
      %p54 = por %p52, %p53
      %p55 = scmp.ne.s32.totalorder %s44, %s45
      %p56 = scmp.eq.s32.totalorder %s22, 0
      %p57 = por %p55, %p56
      %p58 = scmp.ne.s32.totalorder %s44, %s45
      %p59 = scmp.eq.s32.totalorder %s23, 1
      %p60 = por %p58, %p59
      %p62 = scmp.ne.s32.totalorder %s45, %s61
      %p63 = scmp.eq.s32.totalorder %s23, 0
      %p64 = por %p62, %p63
      %s65 = sadd.s32 %s24, %s25
      %s66 = sadd.s32 %s36, %s32
      %s67 = ssub.s32 %s65, %s66
      %p68 = scmp.eq.s32.totalorder %s67, 0
      %s70 = sadd.s32 %s69, 1
      %s71 = scalar_select %p68, %s69, %s70
      %p74 = pneg %p68
      %p75 = scmp.eq.s32.totalorder %s17, 1
      %p76 = por %p74, %p75
      %p77 = scmp.ne.s32.totalorder %s69, %s72
      %p78 = scmp.eq.s32.totalorder %s17, 0
      %p79 = por %p77, %p78
      %p80 = scmp.ne.s32.totalorder %s69, %s72
      %p81 = scmp.eq.s32.totalorder %s22, 1
      %p82 = por %p80, %p81
      %p83 = scmp.ne.s32.totalorder %s72, %s73
      %p84 = scmp.eq.s32.totalorder %s22, 0
      %p85 = por %p83, %p84
      %p86 = scmp.ne.s32.totalorder %s72, %s73
      %p87 = scmp.eq.s32.totalorder %s23, 1
      %p88 = por %p86, %p87
      %p90 = scmp.ne.s32.totalorder %s73, %s89
      %p91 = scmp.eq.s32.totalorder %s23, 0
      %p92 = por %p90, %p91
      %s93 = ssub.s32 %s24, %s36
      %p94 = scmp.eq.s32.totalorder %s93, 0
      %s96 = sadd.s32 %s95, 1
      %s97 = scalar_select %p94, %s95, %s96
      %p100 = pneg %p94
      %p101 = scmp.eq.s32.totalorder %s17, 1
      %p102 = por %p100, %p101
      %p103 = scmp.ne.s32.totalorder %s95, %s98
      %p104 = scmp.eq.s32.totalorder %s17, 0
      %p105 = por %p103, %p104
      %p106 = scmp.ne.s32.totalorder %s95, %s98
      %p107 = scmp.eq.s32.totalorder %s22, 1
      %p108 = por %p106, %p107
      %p109 = scmp.ne.s32.totalorder %s98, %s99
      %p110 = scmp.eq.s32.totalorder %s22, 0
      %p111 = por %p109, %p110
      %p112 = scmp.ne.s32.totalorder %s98, %s99
      %p113 = scmp.eq.s32.totalorder %s23, 1
      %p114 = por %p112, %p113
      %p116 = scmp.ne.s32.totalorder %s99, %s115
      %p117 = scmp.eq.s32.totalorder %s23, 0
      %p118 = por %p116, %p117
      %p119 = scmp.le.s32.totalorder 1, %s17
      %p120 = scmp.lt.s32.totalorder %s17, 3
      %p121 = pnand %p119, %p120
      %p122 = pneg %p121
      // Predicated region
      $region9: #{tpu_custom_call.1} parent=5 // pred_check
        _
      $region10: #{tpu_custom_call.1} parent=5 // pred_check_branch
        %124 = sbr.rel (%p121) target = $region12
      $region11: #{tpu_custom_call.1} parent=5 // pred_region
        %s125 = ssub.s32 %s17, 1
      $region12: #{tpu_custom_call.1} parent=5 // pred_fallthru
        _
      %p126 = scmp.lt.s32.totalorder %s17, 2
      // Predicated region
      $region13: #{tpu_custom_call.1} parent=5 // pred_check
        %p127 = pneg %p126
      $region14: #{tpu_custom_call.1} parent=5 // pred_check_branch
        %129 = sbr.rel (%p127) target = $region16
      $region15: #{tpu_custom_call.1} parent=5 // pred_region
        // Predicated region
        $region17: #{tpu_custom_call.1} parent=15 // pred_check
          %p130 = pneg %p51
        $region18: #{tpu_custom_call.1} parent=15 // pred_check_branch
          %132 = sbr.rel (%p130) target = $region20
        $region19: #{tpu_custom_call.1} parent=15 // pred_region
          %s133 = sand.u32 %s41, 1
          %s134 = scalar_lea.sflag [#allocation4], %s133
          %s135 = sand.u32 %s41, 1
          %s136 = smul.addr %s135, 16
          %s137 = scalar_lea.vmem [#allocation3], %s136
          %s138 = sadd.s32 %s24, %s25
          %140 = vsyncadd %s134, 0
          %s141 = smul.addr %s138, 8
          %s142 = scalar_lea.hbm %s0, %s141
          %s143 = sshll.u32 %s142, 4
          %s144 = int_to_ptr.hbm [resolvable:$true] %s143
          %s145 = sshll.u32 %s137, 4
          %s146 = int_to_ptr.vmem [resolvable:$true] %s145
          %151 = dma.hbm_to_vmem [thread:$0]  %s144, 256, %s146, %s134, 256, 128, 8
        $region20: #{tpu_custom_call.1} parent=15 // pred_fallthru
          _
        // Predicated region
        $region21: #{tpu_custom_call.1} parent=15 // pred_check
          %p152 = pneg %p79
        $region22: #{tpu_custom_call.1} parent=15 // pred_check_branch
          %154 = sbr.rel (%p152) target = $region24
        $region23: #{tpu_custom_call.1} parent=15 // pred_region
          %s155 = sand.u32 %s69, 1
          %s156 = scalar_lea.sflag [#allocation7], %s155
          %s157 = sand.u32 %s69, 1
          %s158 = scalar_lea.vmem [#allocation6], %s157
          %s159 = sadd.s32 %s24, %s25
          %161 = vsyncadd %s156, 0
          %s162 = scalar_lea.hbm %s1, %s159
          %s164 = sshll.u32 %s162, 4
          %s165 = int_to_ptr.hbm [resolvable:$true] %s164
          %s166 = sshll.u32 %s158, 4
          %s167 = int_to_ptr.vmem [resolvable:$true] %s166
          %169 = dma.hbm_to_vmem [thread:$0]  %s165, 16, %s167, %s156
        $region24: #{tpu_custom_call.1} parent=15 // pred_fallthru
          _
      $region16: #{tpu_custom_call.1} parent=5 // pred_fallthru
        _
      %p170 = scmp.le.s32.totalorder 1, %s17
      %p171 = scmp.lt.s32.totalorder %s17, 3
      %p172 = pnand %p170, %p171
      %p173 = pneg %p172
      // Predicated region
      $region25: #{tpu_custom_call.1} parent=5 // pred_check
        _
      $region26: #{tpu_custom_call.1} parent=5 // pred_check_branch
        %175 = sbr.rel (%p172) target = $region28
      $region27: #{tpu_custom_call.1} parent=5 // pred_region
        %s176 = ssub.s32 %s17, 1
        %s177 = sand.u32 %s44, 1
        %s178 = scalar_lea.sflag [#allocation4], %s177
        %s179 = sand.u32 %s44, 1
        %s180 = smul.addr %s179, 16
        %s181 = scalar_lea.vmem [#allocation3], %s180
        // Predicated region
        $region29: #{tpu_custom_call.1} parent=27 // pred_check
          %p182 = pneg %p57
        $region30: #{tpu_custom_call.1} parent=27 // pred_check_branch
          %184 = sbr.rel (%p182) target = $region32
        $region31: #{tpu_custom_call.1} parent=27 // pred_region
          %186 = dma.done %s178, 256
        $region32: #{tpu_custom_call.1} parent=27 // pred_fallthru
          _
        %s187 = sand.u32 %s72, 1
        %s188 = scalar_lea.sflag [#allocation7], %s187
        %s189 = sand.u32 %s72, 1
        %s190 = scalar_lea.vmem [#allocation6], %s189
        // Predicated region
        $region33: #{tpu_custom_call.1} parent=27 // pred_check
          %p191 = pneg %p85
        $region34: #{tpu_custom_call.1} parent=27 // pred_check_branch
          %193 = sbr.rel (%p191) target = $region36
        $region35: #{tpu_custom_call.1} parent=27 // pred_region
          %195 = dma.done %s188, 16
        $region36: #{tpu_custom_call.1} parent=27 // pred_fallthru
          _
        %s196 = sand.u32 %s44, 1
        %s197 = scalar_lea.sflag [#allocation4], %s196
        %s198 = sand.u32 %s44, 1
        %s199 = smul.addr %s198, 16
        %s200 = scalar_lea.vmem [#allocation3], %s199
        %p201 = pneg %p57
        %p202 = pneg %p54
        %s203 = sand.u32 %s72, 1
        %s204 = scalar_lea.sflag [#allocation7], %s203
        %s205 = sand.u32 %s72, 1
        %s206 = scalar_lea.vmem [#allocation6], %s205
        %p207 = pneg %p85
        %p208 = pneg %p82
        %p209 = pneg %p111
        %p210 = pneg %p108
        %s211 = sand.u32 %s98, 1
        %s212 = scalar_lea.sflag [#allocation5], %s211
        %s213 = sand.u32 %s98, 1
        %s214 = scalar_lea.vmem [#allocation8], %s213
        %s215 = sadd.s32 %s26, %s27
        %s216 = sadd.s32 %s26, %s27
        %p217 = scmp.eq.s32.totalorder %s27, 0
        // Predicated region
        $region37: #{tpu_custom_call.1} parent=27 // pred_check
          %p218 = pneg %p217
        $region38: #{tpu_custom_call.1} parent=27 // pred_check_branch
          %220 = sbr.rel (%p218) target = $region40
        $region39: #{tpu_custom_call.1} parent=27 // pred_region
          %221 = vst [vmem:[#allocation2] sm:$0x1] 0.0
        $region40: #{tpu_custom_call.1} parent=27 // pred_fallthru
          _
        %v222 = vld [vmem:[%s181] sm:$0xff]
        %v223 = vld [vmem:[%s181 + $0x8] sm:$0x3]
        %v224 = vld [vmem:[%s190] sm:$0x1]
        %v225 = vlaneseq
        %v226 = vshrl.u32 %v225, 7
        %v227 = vadd.s32 %v226, 8
        %v228 = vperm.slane %v224, 0
        %vm229 = vcmp.eq.s32.totalorder %v226, %v228
        %vm230 = vcmp.eq.s32.totalorder %v227, %v228
        %vm231 = vcmask 1041408
        %v232 = vsel %vm231, %v223, -inf
        %v233 = vmax.f32 %v222, %v232
        %v234 = vrot.slane %v233, 4
        %v235 = vmax.f32 %v233, %v234
        %v236 = vrot.slane %v235, 2
        %v237 = vmax.f32 %v235, %v236
        %v238 = vrot.slane %v237, 1
        %v239 = vmax.f32 %v237, %v238
        %v240 = vsub.f32 %v222, %v239
        %v241 = vsub.f32 %v223, %v239
        %v242 = vmul.f32 %v240, 1.442695
        %v243 = vpow.pop %v242
        %v244 = vmul.f32 %v241, 1.442695
        %v245 = vpow.pop %v244
        %v246 = vsel %vm231, %v245, 0.0
        %v247 = vadd.f32 %v243, %v246
        %v248 = vrot.slane %v247, 4
        %v249 = vadd.f32 %v247, %v248
        %v250 = vrot.slane %v249, 2
        %v251 = vadd.f32 %v249, %v250
        %v252 = vrot.slane %v251, 1
        %v253 = vadd.f32 %v251, %v252
        %v254 = vsel %vm229, %v240, 0.0
        %v255 = vsel %vm230, %v241, 0.0
        %v256 = vsel %vm231, %v255, 0.0
        %v257 = vadd.f32 %v254, %v256
        %v258 = vrot.slane %v257, 4
        %v259 = vadd.f32 %v257, %v258
        %v260 = vrot.slane %v259, 2
        %v261 = vadd.f32 %v259, %v260
        %v262 = vrot.slane %v261, 1
        %v263 = vadd.f32 %v261, %v262
        %v264 = vlog2.pop %v253
        %v265 = vmul.f32 %v264, 0.6931472
        %v266 = vsub.f32 %v265, %v263
        %v267 = vrcp.pop %v253
        %v268 = vmul.f32 %v253, %v267
        %v269 = vsub.f32 2.0, %v268
        %v270 = vmul.f32 %v267, %v269
        %v271 = vmul.f32 %v243, %v270
        %v272 = vmul.f32 %v245, %v270
        %v273 = vmax.f32 %v271, 1e-07
        %v274 = vmax.f32 %v272, 1e-07
        %v275 = vsel %vm229, 0.0, %v273
        %v276 = vsel %vm230, 0.0, %v274
        %v277 = vsel %vm231, %v276, 0.0
        %v278 = vadd.f32 %v275, %v277
        %v279 = vrot.slane %v278, 4
        %v280 = vadd.f32 %v278, %v279
        %v281 = vrot.slane %v280, 2
        %v282 = vadd.f32 %v280, %v281
        %v283 = vrot.slane %v282, 1
        %v284 = vadd.f32 %v282, %v283
        %v285 = vmul.f32 %v284, 9.2103405
        %v286 = vadd.f32 %v266, %v285
        %s287 = sadd.s32 %s26, %s27
        %s288 = smul.u32 %s287, 128
        %s289 = sadd.s32 %s288, 128
        %p290 = scmp.gt.s32.totalorder %s289, 8
        // Predicated region
        $region41: #{tpu_custom_call.1} parent=27 // pred_check
          %p291 = pneg %p290
        $region42: #{tpu_custom_call.1} parent=27 // pred_check_branch
          %293 = sbr.rel (%p291) target = $region44
        $region43: #{tpu_custom_call.1} parent=27 // pred_region
          %v294 = vlaneseq
          %v295 = vand.u32 %v294, 127
          %v296 = vstv %s288
          %v297 = vadd.s32 %v296, %v295
          %v298 = vld [vmem:[#allocation2] sm:$0x1]
          %vm299 = vcmp.lt.s32.totalorder %v297, 8
          %v300 = vsel %vm299, %v286, 0.0
          %v301 = vadd.f32 %v298, %v300
          %302 = vst [vmem:[#allocation2] sm:$0x1] %v301
        $region44: #{tpu_custom_call.1} parent=27 // pred_fallthru
          _
        %p303 = scmp.le.s32.totalorder %s289, 8
        // Predicated region
        $region45: #{tpu_custom_call.1} parent=27 // pred_check
          %p304 = pneg %p303
        $region46: #{tpu_custom_call.1} parent=27 // pred_check_branch
          %306 = sbr.rel (%p304) target = $region48
        $region47: #{tpu_custom_call.1} parent=27 // pred_region
          %v307 = vld [vmem:[#allocation2] sm:$0x1]
          %v308 = vadd.f32 %v307, %v286
          %309 = vst [vmem:[#allocation2] sm:$0x1] %v308
        $region48: #{tpu_custom_call.1} parent=27 // pred_fallthru
          _
        // Predicated region
        $region49: #{tpu_custom_call.1} parent=27 // pred_check
          %p310 = pneg %p217
        $region50: #{tpu_custom_call.1} parent=27 // pred_check_branch
          %312 = sbr.rel (%p310) target = $region52
        $region51: #{tpu_custom_call.1} parent=27 // pred_region
          %v313 = vld [vmem:[#allocation2] sm:$0x1]
          %vm314 = vcmask 1040384
          %v315 = vsel %vm314, %v313, 0.0
          %316 = vadd.xlane.f32.xlu0 %v315
          %v317 = vpop.xlane.xlu0 %316
          %v318 = vrot.slane %v317, 4
          %v319 = vadd.f32 %v317, %v318
          %v320 = vrot.slane %v319, 2
          %v321 = vadd.f32 %v319, %v320
          %v322 = vrot.slane %v321, 1
          %v323 = vadd.f32 %v321, %v322
          %s324 = vtos %v323
          %v325 = vstv %s324
          %326 = vst [vmem:[%s214] sm:$0x1] %v325
        $region52: #{tpu_custom_call.1} parent=27 // pred_fallthru
          _
        %s327 = sand.u32 %s98, 1
        %s328 = scalar_lea.sflag [#allocation5], %s327
        %s329 = sand.u32 %s98, 1
        %s330 = scalar_lea.vmem [#allocation8], %s329
        // Predicated region
        $region53: #{tpu_custom_call.1} parent=27 // pred_check
          %p331 = pneg %p108
        $region54: #{tpu_custom_call.1} parent=27 // pred_check_branch
          %333 = sbr.rel (%p331) target = $region56
        $region55: #{tpu_custom_call.1} parent=27 // pred_region
          %335 = vsyncadd %s328, 0
          %s336 = scalar_lea.hbm %s2, %s26
          %s338 = sshll.u32 %s330, 4
          %s339 = int_to_ptr.vmem [resolvable:$true] %s338
          %s340 = sshll.u32 %s336, 4
          %s341 = int_to_ptr.hbm [resolvable:$true] %s340
          %343 = dma.vmem_to_hbm [thread:$0]  %s339, 16, %s341, %s328
        $region56: #{tpu_custom_call.1} parent=27 // pred_fallthru
          _
      $region28: #{tpu_custom_call.1} parent=5 // pred_fallthru
        _
      %p344 = scmp.le.s32.totalorder 2, %s17
      // Predicated region
      $region57: #{tpu_custom_call.1} parent=5 // pred_check
        %p345 = pneg %p344
      $region58: #{tpu_custom_call.1} parent=5 // pred_check_branch
        %347 = sbr.rel (%p345) target = $region60
      $region59: #{tpu_custom_call.1} parent=5 // pred_region
        %s348 = ssub.s32 %s17, 2
        // Predicated region
        $region61: #{tpu_custom_call.1} parent=59 // pred_check
          %p349 = pneg %p114
        $region62: #{tpu_custom_call.1} parent=59 // pred_check_branch
          %351 = sbr.rel (%p349) target = $region64
        $region63: #{tpu_custom_call.1} parent=59 // pred_region
          %s352 = sand.u32 %s99, 1
          %s353 = scalar_lea.sflag [#allocation5], %s352
          %s354 = sand.u32 %s99, 1
          %s355 = scalar_lea.vmem [#allocation8], %s354
          %357 = dma.done %s353, 16
        $region64: #{tpu_custom_call.1} parent=59 // pred_fallthru
          _
      $region60: #{tpu_custom_call.1} parent=5 // pred_fallthru
        _
    $region6: #{tpu_custom_call.1} parent=1 // loop_footer
      %s21 = sadd.s32 1, %s17
    $region7: #{tpu_custom_call.1} parent=1 // loop_footer_branch
      %16 = sbr.rel target = $region3
    $region8: #{tpu_custom_call.1} parent=1 // loop_exit
      _
    %358 = vsyncpa [#allocation4], 1
    %s359 = scalar_lea.sflag [#allocation4], 1
    %360 = vsyncpa %s359, 1
    %361 = vsyncpa [#allocation7], 1
    %s362 = scalar_lea.sflag [#allocation7], 1
    %363 = vsyncpa %s362, 1
    %364 = vsyncpa [#allocation5], 1
    %s365 = scalar_lea.sflag [#allocation5], 1
    %366 = vsyncpa %s365, 1

</llo_original>
